<compile_context>
chip_gen: v5e
topology: v5e:2x2
jax: 0.10.0
libtpu: 0.0.40
codegen_flags: <defaults>
</compile_context>

<pallas_src>
import jax
import jax.numpy as jnp
from jax.experimental import pallas as pl
from jax.experimental.pallas import tpu as pltpu

# ---------------- model hyper-parameters (small, consistent with module) ----
BATCH = 8
INPUT_DIM = 32          # input_dim
NUM_BLOCKS = 2          # num_blocks
BLOCK_DIM = 16          # block_dim
REDUCTION_RATIO = 1     # reduction_ratio -> mask hidden = INPUT_DIM * 1
HIDDEN_UNITS = 32       # single hidden layer in the DNN (hidden_units=[32])
OUTPUT_DIM = 1          # output_dim
LN_EPS = 1e-5           # torch.nn.LayerNorm default

MASK_HID = int(INPUT_DIM * REDUCTION_RATIO)
CONCAT_DIM = BLOCK_DIM * NUM_BLOCKS

DOT_DTYPE = jnp.bfloat16   # MXU operand dtype (set to jnp.float32 for exact f32)
ROW_ALIGN = 16             # bf16 sublane packing -> keep row tiles 16-aligned


# ---------------------------------------------------------------------------
# kernel
# ---------------------------------------------------------------------------
def parallel_masknet_kernel(
    x_ref,              # (TB, INPUT_DIM)              DOT_DTYPE
    w1s_ref, b1s_ref,   # (D, NB*MH) DOT, (1, NB*MH) f32          column-stacked
    w2bd_ref, b2s_ref,  # (NB*MH, NB*D) DOT, (1, NB*D) f32        block-diagonal
    w3bd_ref,           # (NB*D, NB*BD) DOT                        block-diagonal
    lnm_ref,            # (NB*BD, NB*BD) f32   segment-averaging matrix (MXU LN)
    ln_g_ref, ln_b_ref,  # (1, NB*BD) f32 each
    wd_ref, bd_ref,     # (NB*BD, HIDDEN) DOT, (1, HIDDEN) f32
    wo_ref,             # (1, HIDDEN) f32
    bo_ref,             # (1, 1) f32 in SMEM
    out_ref,            # (1, 1, TB) f32   lane-dense output row
):
    f32 = jnp.float32
    x = x_ref[...]                                               # (TB, D)

    # --- all mask_layers fused into two wide MXU matmuls --------------------
    h = jnp.dot(x, w1s_ref[...], preferred_element_type=f32) + b1s_ref[...]
    h = jnp.maximum(h, 0.0)                                      # (TB, NB*MH) f32
    v_all = jnp.dot(h.astype(DOT_DTYPE), w2bd_ref[...],
                    preferred_element_type=f32) + b2s_ref[...]   # (TB, NB*D) f32

    # elementwise mask: v_mask_i * X for every block (x replicated along lanes)
    x_rep = jnp.concatenate([x.astype(f32)] * NUM_BLOCKS, axis=-1)
    masked = (v_all * x_rep).astype(DOT_DTYPE)                   # (TB, NB*D)

    # --- all hidden_layers (Linear, no bias) fused: one block-diag matmul ---
    z = jnp.dot(masked, w3bd_ref[...], preferred_element_type=f32)  # (TB, NB*BD) f32

    # --- segment-wise LayerNorm; block means / E[z^2] computed on the MXU ---
    mean_b = jnp.dot(z, lnm_ref[...], preferred_element_type=f32)      # (TB, NB*BD)
    ez2_b = jnp.dot(z * z, lnm_ref[...], preferred_element_type=f32)   # (TB, NB*BD)
    var_b = jnp.maximum(ez2_b - mean_b * mean_b, 0.0)
    zn = (z - mean_b) * jax.lax.rsqrt(var_b + LN_EPS)                  # rsqrt -> EUP
    v = jnp.maximum(zn * ln_g_ref[...] + ln_b_ref[...], 0.0)           # ReLU

    # --- DNN hidden layer: wd kept in its original concat shape -> one dot --
    d = jnp.dot(v.astype(DOT_DTYPE), wd_ref[...],
                preferred_element_type=f32) + bd_ref[...]
    d = jnp.maximum(d, 0.0)                                      # (TB, HIDDEN) f32

    # --- output head (OUTPUT_DIM == 1): VPU multiply + lane reduce ----------
    out_row = jnp.sum(d * wo_ref[...], axis=-1) + bo_ref[0, 0]   # (TB,)
    out_ref[0, 0, :] = out_row.astype(out_ref.dtype)


# ---------------------------------------------------------------------------
# wrapper helpers
# ---------------------------------------------------------------------------
def _cdiv(a, b):
    return -(-a // b)


def _round_up(a, m):
    return _cdiv(a, m) * m


def _tpu_target():
    """(is_v7x, physical_vmem_bytes, max_batch_tile)."""
    kind = ""
    try:
        kind = jax.devices()[0].device_kind.lower()
    except Exception:
        pass
    is_v7 = ("v7" in kind) or ("7x" in kind)
    try:
        vmem_cap = int(pltpu.get_tpu_info().vmem_capacity_bytes)
    except Exception:
        vmem_cap = (64 if is_v7 else 128) * (2 ** 20)
    max_tb = 4096 if is_v7 else 8192   # 1 big tile on v5e/v6e, moderate on v7x
    return is_v7, vmem_cap, max_tb


def _choose_tile(batch, max_tb, two_steps):
    """Pick (tile_rows, padded_rows, grid_steps) with minimal padding."""
    rows = _round_up(batch, ROW_ALIGN)
    n_steps = max(1, _cdiv(rows, max_tb))
    if two_steps and n_steps == 1 and rows >= 2 * ROW_ALIGN:
        n_steps = 2                      # give both v7x TensorCores a tile
    tb = _round_up(_cdiv(rows, n_steps), ROW_ALIGN)
    return tb, tb * n_steps, n_steps


def _prepare_params(params):
    """Fuse per-block weights into wide / block-diagonal matrices (one-time)."""
    (w1, b1, w2, b2, w3, ln_g, ln_b, wd, bd, wo, bo) = params
    nb, f32 = NUM_BLOCKS, jnp.float32

    # mask layer 1: column-stacked
    w1s = jnp.concatenate([w1[i] for i in range(nb)], axis=-1).astype(DOT_DTYPE)
    b1s = jnp.concatenate([b1[i] for i in range(nb)], axis=-1).astype(f32)

    # mask layer 2: block-diagonal
    w2bd = jnp.zeros((nb * MASK_HID, nb * INPUT_DIM), f32)
    for i in range(nb):
        w2bd = w2bd.at[i * MASK_HID:(i + 1) * MASK_HID,
                       i * INPUT_DIM:(i + 1) * INPUT_DIM].set(w2[i])
    w2bd = w2bd.astype(DOT_DTYPE)
    b2s = jnp.concatenate([b2[i] for i in range(nb)], axis=-1).astype(f32)

    # hidden layer (no bias): block-diagonal -> ONE matmul for all blocks
    w3bd = jnp.zeros((nb * INPUT_DIM, nb * BLOCK_DIM), f32)
    for i in range(nb):
        w3bd = w3bd.at[i * INPUT_DIM:(i + 1) * INPUT_DIM,
                       i * BLOCK_DIM:(i + 1) * BLOCK_DIM].set(w3[i])
    w3bd = w3bd.astype(DOT_DTYPE)

    # constant segment-averaging matrix: (z @ lnm)[:, j] = mean of z over j's block
    blk = jnp.arange(nb * BLOCK_DIM) // BLOCK_DIM
    lnm = (blk[:, None] == blk[None, :]).astype(f32) * (1.0 / BLOCK_DIM)

    ln_g_c = jnp.concatenate([ln_g[i] for i in range(nb)], axis=-1).astype(f32)
    ln_b_c = jnp.concatenate([ln_b[i] for i in range(nb)], axis=-1).astype(f32)

    wd_q = wd.astype(DOT_DTYPE)                  # original (CONCAT_DIM, HIDDEN)
    bd_f = bd.astype(f32)
    wo_row = wo.reshape(1, HIDDEN_UNITS).astype(f32)
    bo_f = bo.reshape(1, 1).astype(f32)          # -> SMEM scalar

    return (w1s, b1s, w2bd, b2s, w3bd, lnm, ln_g_c, ln_b_c,
            wd_q, bd_f, wo_row, bo_f)


def parallel_masknet(x, params):
    assert OUTPUT_DIM == 1
    batch = x.shape[0]
    is_v7, vmem_cap, max_tb = _tpu_target()
    tb, pb, grid_steps = _choose_tile(batch, max_tb, two_steps=is_v7)

    xq = x.astype(DOT_DTYPE)
    if pb != batch:
        xq = jnp.pad(xq, ((0, pb - batch), (0, 0)))

    kparams = _prepare_params(params)
    param_bytes = sum(int(p.size) * p.dtype.itemsize for p in kparams)

    nb, d0, mh, bdim, hid = NUM_BLOCKS, INPUT_DIM, MASK_HID, BLOCK_DIM, HIDDEN_UNITS
    flops_row = 2 * (d0 * nb * mh                       # x @ w1s
                     + (nb * mh) * (nb * d0)            # h @ w2bd
                     + (nb * d0) * (nb * bdim)          # masked @ w3bd
                     + 2 * (nb * bdim) * (nb * bdim)    # LN mean / E[z^2] on MXU
                     + (nb * bdim) * hid                # v @ wd
                     + hid)                             # output head
    cost = pl.CostEstimate(
        flops=int(pb * flops_row),
        transcendentals=int(pb * nb * bdim),            # rsqrt
        bytes_accessed=int(xq.dtype.itemsize * pb * d0 + 4 * pb + param_bytes),
    )

    # never request more than physical VMEM (64 MiB on v7x); plenty of headroom
    vmem_limit = int(max(32 * (2 ** 20), min(vmem_cap * 3 // 4, 96 * (2 ** 20))))

    full = lambda a: pl.BlockSpec(a.shape, lambda b: (0,) * a.ndim)
    vmem_params, bo_param = kparams[:-1], kparams[-1]

    out = pl.pallas_call(
        parallel_masknet_kernel,
        out_shape=jax.ShapeDtypeStruct((grid_steps, 1, tb), jnp.float32),
        grid_spec=pltpu.PrefetchScalarGridSpec(
            num_scalar_prefetch=0,
            grid=(grid_steps,),
            in_specs=[pl.BlockSpec((tb, INPUT_DIM), lambda b: (b, 0))]
                     + [full(p) for p in vmem_params]
                     + [pl.BlockSpec(memory_space=pltpu.MemorySpace.SMEM)],
            out_specs=pl.BlockSpec((1, 1, tb), lambda b: (b, 0, 0)),
        ),
        compiler_params=pltpu.CompilerParams(
            dimension_semantics=("parallel",),
            vmem_limit_bytes=vmem_limit,
        ),
        cost_estimate=cost,
    )(xq, *vmem_params, bo_param)

    # lane-dense (grid, 1, tb) -> (batch, 1); row g*tb + t == lane t of step g
    return out.reshape(grid_steps * tb, 1)[:batch]


# ---------------------------------------------------------------------------
# params / reference (module-style layout, matches the PyTorch model)
# ---------------------------------------------------------------------------
def init_params(key):
    ks = jax.random.split(key, 12)
    s = 0.1
    w1 = s * jax.random.normal(ks[0], (NUM_BLOCKS, INPUT_DIM, MASK_HID), jnp.float32)
    b1 = s * jax.random.normal(ks[1], (NUM_BLOCKS, 1, MASK_HID), jnp.float32)
    w2 = s * jax.random.normal(ks[2], (NUM_BLOCKS, MASK_HID, INPUT_DIM), jnp.float32)
    b2 = s * jax.random.normal(ks[3], (NUM_BLOCKS, 1, INPUT_DIM), jnp.float32)
    w3 = s * jax.random.normal(ks[4], (NUM_BLOCKS, INPUT_DIM, BLOCK_DIM), jnp.float32)
    ln_g = jnp.ones((NUM_BLOCKS, 1, BLOCK_DIM), jnp.float32)
    ln_b = jnp.zeros((NUM_BLOCKS, 1, BLOCK_DIM), jnp.float32)
    wd = s * jax.random.normal(ks[5], (CONCAT_DIM, HIDDEN_UNITS), jnp.float32)
    bd = s * jax.random.normal(ks[6], (1, HIDDEN_UNITS), jnp.float32)
    wo = s * jax.random.normal(ks[7], (HIDDEN_UNITS, OUTPUT_DIM), jnp.float32)
    bo = s * jax.random.normal(ks[8], (1, OUTPUT_DIM), jnp.float32)
    return (w1, b1, w2, b2, w3, ln_g, ln_b, wd, bd, wo, bo)


def _layernorm_ref(z, gamma, beta, eps=LN_EPS):
    mean = jnp.mean(z, axis=-1, keepdims=True)
    var = jnp.mean((z - mean) ** 2, axis=-1, keepdims=True)
    return (z - mean) * jax.lax.rsqrt(var + eps) * gamma + beta


def reference_forward(x, params):
    """Pure-JAX reference mirroring the PyTorch forward for validation."""
    (w1, b1, w2, b2, w3, ln_g, ln_b, wd, bd, wo, bo) = params
    outs = []
    for i in range(NUM_BLOCKS):
        h = jnp.maximum(x @ w1[i] + b1[i], 0.0)
        v_mask = h @ w2[i] + b2[i]
        z = (v_mask * x) @ w3[i]
        outs.append(jnp.maximum(_layernorm_ref(z, ln_g[i], ln_b[i]), 0.0))
    concat = jnp.concatenate(outs, axis=-1)
    d = jnp.maximum(concat @ wd + bd, 0.0)
    return d @ wo + bo


if __name__ == "__main__":
    key = jax.random.PRNGKey(0)
    kx, kp = jax.random.split(key)
    x = jax.random.normal(kx, (BATCH, INPUT_DIM), jnp.float32)
    params = init_params(kp)

    out = parallel_masknet(x, params)
    out = jax.block_until_ready(out)

    # Reference with the same operand quantization the kernel's MXU path uses
    # (bf16 inputs/weights, f32 accumulation & LayerNorm math).
    def _q(a):
        return a.astype(DOT_DTYPE).astype(jnp.float32)

    (w1, b1, w2, b2, w3, ln_g, ln_b, wd, bd, wo, bo) = params
    params_q = (_q(w1), b1, _q(w2), b2, _q(w3), ln_g, ln_b, _q(wd), bd, wo, bo)
    ref = reference_forward(_q(x), params_q)

    tol = 2e-2 if DOT_DTYPE == jnp.bfloat16 else 1e-4
    assert out.shape == (BATCH, OUTPUT_DIM)
    assert jnp.allclose(out, ref, atol=tol, rtol=tol), (
        float(jnp.max(jnp.abs(out - ref))), out, ref)

    print("KERNEL_OK")
</pallas_src>

<mosaic_0001>
module attributes {stable_mosaic.version = 11 : i64} {
  func.func @parallel_masknet_kernel(%arg0: i32, %arg1: memref<16x32xbf16, #tpu.memory_space<vmem>>, %arg2: memref<32x64xbf16, #tpu.memory_space<vmem>>, %arg3: memref<1x64xf32, #tpu.memory_space<vmem>>, %arg4: memref<64x64xbf16, #tpu.memory_space<vmem>>, %arg5: memref<1x64xf32, #tpu.memory_space<vmem>>, %arg6: memref<64x32xbf16, #tpu.memory_space<vmem>>, %arg7: memref<32x32xf32, #tpu.memory_space<vmem>>, %arg8: memref<1x32xf32, #tpu.memory_space<vmem>>, %arg9: memref<1x32xf32, #tpu.memory_space<vmem>>, %arg10: memref<32x32xbf16, #tpu.memory_space<vmem>>, %arg11: memref<1x32xf32, #tpu.memory_space<vmem>>, %arg12: memref<1x32xf32, #tpu.memory_space<vmem>>, %arg13: memref<1x1xf32, #tpu.memory_space<smem>>, %arg14: memref<1x1x16xf32, #tpu.memory_space<vmem>>) attributes {dimension_semantics = [#tpu.dimension_semantics<parallel>], iteration_bounds = array<i64: 1>, scalar_prefetch = 0 : i64, scratch_operands = 0 : i64, tpu.core_type = #tpu.core_type<tc>, window_params = [{transform_indices = @transform_0, window_bounds = array<i64: 16, 32>}, {pipeline_mode = #tpu.pipeline_mode<synchronous>, transform_indices = @transform_1, window_bounds = array<i64: 32, 64>}, {pipeline_mode = #tpu.pipeline_mode<synchronous>, transform_indices = @transform_2, window_bounds = array<i64: 1, 64>}, {pipeline_mode = #tpu.pipeline_mode<synchronous>, transform_indices = @transform_3, window_bounds = array<i64: 64, 64>}, {pipeline_mode = #tpu.pipeline_mode<synchronous>, transform_indices = @transform_4, window_bounds = array<i64: 1, 64>}, {pipeline_mode = #tpu.pipeline_mode<synchronous>, transform_indices = @transform_5, window_bounds = array<i64: 64, 32>}, {pipeline_mode = #tpu.pipeline_mode<synchronous>, transform_indices = @transform_6, window_bounds = array<i64: 32, 32>}, {pipeline_mode = #tpu.pipeline_mode<synchronous>, transform_indices = @transform_7, window_bounds = array<i64: 1, 32>}, {pipeline_mode = #tpu.pipeline_mode<synchronous>, transform_indices = @transform_8, window_bounds = array<i64: 1, 32>}, {pipeline_mode = #tpu.pipeline_mode<synchronous>, transform_indices = @transform_9, window_bounds = array<i64: 32, 32>}, {pipeline_mode = #tpu.pipeline_mode<synchronous>, transform_indices = @transform_10, window_bounds = array<i64: 1, 32>}, {pipeline_mode = #tpu.pipeline_mode<synchronous>, transform_indices = @transform_11, window_bounds = array<i64: 1, 32>}, {transform_indices = @transform_12, window_bounds = array<i64: 1, 1>}, {transform_indices = @transform_13, window_bounds = array<i64: 1, 1, 16>}]} {
    %c0 = arith.constant 0 : index
    %c0_0 = arith.constant 0 : index
    %0 = vector.load %arg1[%c0, %c0_0] : memref<16x32xbf16, #tpu.memory_space<vmem>>, vector<16x32xbf16>
    %c0_1 = arith.constant 0 : index
    %c0_2 = arith.constant 0 : index
    %1 = vector.load %arg2[%c0_1, %c0_2] : memref<32x64xbf16, #tpu.memory_space<vmem>>, vector<32x64xbf16>
    %cst = arith.constant dense<0.000000e+00> : vector<16x64xf32>
    %2 = tpu.matmul %0, %1, %cst {dimension_numbers = #tpu.dot_dimension_numbers<[1], [0], [0], [1], [0, 0, 1, 1], [], []>} : vector<16x32xbf16>, vector<32x64xbf16>, vector<16x64xf32> -> vector<16x64xf32>
    %c0_3 = arith.constant 0 : index
    %c0_4 = arith.constant 0 : index
    %3 = vector.load %arg3[%c0_3, %c0_4] : memref<1x64xf32, #tpu.memory_space<vmem>>, vector<1x64xf32>
    %4 = vector.broadcast %3 : vector<1x64xf32> to vector<16x64xf32>
    %5 = arith.addf %2, %4 : vector<16x64xf32>
    %cst_5 = arith.constant 0.000000e+00 : f32
    %6 = vector.broadcast %cst_5 : f32 to vector<16x64xf32>
    %7 = arith.maximumf %5, %6 : vector<16x64xf32>
    %8 = arith.truncf %7 : vector<16x64xf32> to vector<16x64xbf16>
    %c0_6 = arith.constant 0 : index
    %c0_7 = arith.constant 0 : index
    %9 = vector.load %arg4[%c0_6, %c0_7] : memref<64x64xbf16, #tpu.memory_space<vmem>>, vector<64x64xbf16>
    %cst_8 = arith.constant dense<0.000000e+00> : vector<16x64xf32>
    %10 = tpu.matmul %8, %9, %cst_8 {dimension_numbers = #tpu.dot_dimension_numbers<[1], [0], [0], [1], [0, 0, 1, 1], [], []>} : vector<16x64xbf16>, vector<64x64xbf16>, vector<16x64xf32> -> vector<16x64xf32>
    %c0_9 = arith.constant 0 : index
    %c0_10 = arith.constant 0 : index
    %11 = vector.load %arg5[%c0_9, %c0_10] : memref<1x64xf32, #tpu.memory_space<vmem>>, vector<1x64xf32>
    %12 = vector.broadcast %11 : vector<1x64xf32> to vector<16x64xf32>
    %13 = arith.addf %10, %12 : vector<16x64xf32>
    %14 = arith.extf %0 : vector<16x32xbf16> to vector<16x32xf32>
    %15 = tpu.concatenate %14, %14 in 1 : vector<16x32xf32>, vector<16x32xf32> -> vector<16x64xf32>
    %16 = arith.mulf %13, %15 : vector<16x64xf32>
    %17 = arith.truncf %16 : vector<16x64xf32> to vector<16x64xbf16>
    %c0_11 = arith.constant 0 : index
    %c0_12 = arith.constant 0 : index
    %18 = vector.load %arg6[%c0_11, %c0_12] : memref<64x32xbf16, #tpu.memory_space<vmem>>, vector<64x32xbf16>
    %cst_13 = arith.constant dense<0.000000e+00> : vector<16x32xf32>
    %19 = tpu.matmul %17, %18, %cst_13 {dimension_numbers = #tpu.dot_dimension_numbers<[1], [0], [0], [1], [0, 0, 1, 1], [], []>} : vector<16x64xbf16>, vector<64x32xbf16>, vector<16x32xf32> -> vector<16x32xf32>
    %c0_14 = arith.constant 0 : index
    %c0_15 = arith.constant 0 : index
    %20 = vector.load %arg7[%c0_14, %c0_15] : memref<32x32xf32, #tpu.memory_space<vmem>>, vector<32x32xf32>
    %cst_16 = arith.constant dense<0.000000e+00> : vector<16x32xf32>
    %21 = tpu.matmul %19, %20, %cst_16 {dimension_numbers = #tpu.dot_dimension_numbers<[1], [0], [0], [1], [0, 0, 1, 1], [], []>} : vector<16x32xf32>, vector<32x32xf32>, vector<16x32xf32> -> vector<16x32xf32>
    %22 = arith.mulf %19, %19 : vector<16x32xf32>
    %c0_17 = arith.constant 0 : index
    %c0_18 = arith.constant 0 : index
    %23 = vector.load %arg7[%c0_17, %c0_18] : memref<32x32xf32, #tpu.memory_space<vmem>>, vector<32x32xf32>
    %cst_19 = arith.constant dense<0.000000e+00> : vector<16x32xf32>
    %24 = tpu.matmul %22, %23, %cst_19 {dimension_numbers = #tpu.dot_dimension_numbers<[1], [0], [0], [1], [0, 0, 1, 1], [], []>} : vector<16x32xf32>, vector<32x32xf32>, vector<16x32xf32> -> vector<16x32xf32>
    %25 = arith.mulf %21, %21 : vector<16x32xf32>
    %26 = arith.subf %24, %25 : vector<16x32xf32>
    %cst_20 = arith.constant 0.000000e+00 : f32
    %27 = vector.broadcast %cst_20 : f32 to vector<16x32xf32>
    %28 = arith.maximumf %26, %27 : vector<16x32xf32>
    %29 = arith.subf %19, %21 : vector<16x32xf32>
    %cst_21 = arith.constant 9.99999974E-6 : f32
    %30 = vector.broadcast %cst_21 : f32 to vector<16x32xf32>
    %31 = arith.addf %28, %30 : vector<16x32xf32>
    %32 = math.rsqrt %31 : vector<16x32xf32>
    %33 = arith.mulf %29, %32 : vector<16x32xf32>
    %c0_22 = arith.constant 0 : index
    %c0_23 = arith.constant 0 : index
    %34 = vector.load %arg8[%c0_22, %c0_23] : memref<1x32xf32, #tpu.memory_space<vmem>>, vector<1x32xf32>
    %35 = vector.broadcast %34 : vector<1x32xf32> to vector<16x32xf32>
    %36 = arith.mulf %33, %35 : vector<16x32xf32>
    %c0_24 = arith.constant 0 : index
    %c0_25 = arith.constant 0 : index
    %37 = vector.load %arg9[%c0_24, %c0_25] : memref<1x32xf32, #tpu.memory_space<vmem>>, vector<1x32xf32>
    %38 = vector.broadcast %37 : vector<1x32xf32> to vector<16x32xf32>
    %39 = arith.addf %36, %38 : vector<16x32xf32>
    %cst_26 = arith.constant 0.000000e+00 : f32
    %40 = vector.broadcast %cst_26 : f32 to vector<16x32xf32>
    %41 = arith.maximumf %39, %40 : vector<16x32xf32>
    %42 = arith.truncf %41 : vector<16x32xf32> to vector<16x32xbf16>
    %c0_27 = arith.constant 0 : index
    %c0_28 = arith.constant 0 : index
    %43 = vector.load %arg10[%c0_27, %c0_28] : memref<32x32xbf16, #tpu.memory_space<vmem>>, vector<32x32xbf16>
    %cst_29 = arith.constant dense<0.000000e+00> : vector<16x32xf32>
    %44 = tpu.matmul %42, %43, %cst_29 {dimension_numbers = #tpu.dot_dimension_numbers<[1], [0], [0], [1], [0, 0, 1, 1], [], []>} : vector<16x32xbf16>, vector<32x32xbf16>, vector<16x32xf32> -> vector<16x32xf32>
    %c0_30 = arith.constant 0 : index
    %c0_31 = arith.constant 0 : index
    %45 = vector.load %arg11[%c0_30, %c0_31] : memref<1x32xf32, #tpu.memory_space<vmem>>, vector<1x32xf32>
    %46 = vector.broadcast %45 : vector<1x32xf32> to vector<16x32xf32>
    %47 = arith.addf %44, %46 : vector<16x32xf32>
    %cst_32 = arith.constant 0.000000e+00 : f32
    %48 = vector.broadcast %cst_32 : f32 to vector<16x32xf32>
    %49 = arith.maximumf %47, %48 : vector<16x32xf32>
    %c0_33 = arith.constant 0 : index
    %c0_34 = arith.constant 0 : index
    %50 = vector.load %arg12[%c0_33, %c0_34] : memref<1x32xf32, #tpu.memory_space<vmem>>, vector<1x32xf32>
    %51 = vector.broadcast %50 : vector<1x32xf32> to vector<16x32xf32>
    %52 = arith.mulf %49, %51 : vector<16x32xf32>
    %cst_35 = arith.constant dense<0.000000e+00> : vector<16xf32>
    %53 = vector.multi_reduction <add>, %52, %cst_35 [1] : vector<16x32xf32> to vector<16xf32>
    %c0_36 = arith.constant 0 : index
    %c0_37 = arith.constant 0 : index
    %54 = memref.load %arg13[%c0_36, %c0_37] : memref<1x1xf32, #tpu.memory_space<smem>>
    %55 = vector.broadcast %54 : f32 to vector<16xf32>
    %56 = arith.addf %53, %55 : vector<16xf32>
    %c0_38 = arith.constant 0 : index
    %c0_39 = arith.constant 0 : index
    %c0_40 = arith.constant 0 : index
    %57 = vector.load %arg14[%c0_38, %c0_39, %c0_40] : memref<1x1x16xf32, #tpu.memory_space<vmem>>, vector<1x1x16xf32>
    %58 = vector.shape_cast %57 : vector<1x1x16xf32> to vector<16xf32>
    %59 = vector.shape_cast %56 : vector<16xf32> to vector<1x1x16xf32>
    tpu.vector_store %arg14[%c0_38, %c0_39, %c0_40], %59 {strides = array<i32>} : memref<1x1x16xf32, #tpu.memory_space<vmem>>, vector<1x1x16xf32>,
    return
  }
  func.func @transform_0(%arg0: i32) -> (i32, i32) {
    %c0_i32 = arith.constant 0 : i32
    %c0_i32_0 = arith.constant 0 : i32
    return %arg0, %c0_i32 : i32, i32
  }
  func.func @transform_1(%arg0: i32) -> (i32, i32) {
    %c0_i32 = arith.constant 0 : i32
    %c0_i32_0 = arith.constant 0 : i32
    %c0_i32_1 = arith.constant 0 : i32
    return %c0_i32, %c0_i32_0 : i32, i32
  }
  func.func @transform_2(%arg0: i32) -> (i32, i32) {
    %c0_i32 = arith.constant 0 : i32
    %c0_i32_0 = arith.constant 0 : i32
    %c0_i32_1 = arith.constant 0 : i32
    return %c0_i32, %c0_i32_0 : i32, i32
  }
  func.func @transform_3(%arg0: i32) -> (i32, i32) {
    %c0_i32 = arith.constant 0 : i32
    %c0_i32_0 = arith.constant 0 : i32
    %c0_i32_1 = arith.constant 0 : i32
    return %c0_i32, %c0_i32_0 : i32, i32
  }
  func.func @transform_4(%arg0: i32) -> (i32, i32) {
    %c0_i32 = arith.constant 0 : i32
    %c0_i32_0 = arith.constant 0 : i32
    %c0_i32_1 = arith.constant 0 : i32
    return %c0_i32, %c0_i32_0 : i32, i32
  }
  func.func @transform_5(%arg0: i32) -> (i32, i32) {
    %c0_i32 = arith.constant 0 : i32
    %c0_i32_0 = arith.constant 0 : i32
    %c0_i32_1 = arith.constant 0 : i32
    return %c0_i32, %c0_i32_0 : i32, i32
  }
  func.func @transform_6(%arg0: i32) -> (i32, i32) {
    %c0_i32 = arith.constant 0 : i32
    %c0_i32_0 = arith.constant 0 : i32
    %c0_i32_1 = arith.constant 0 : i32
    return %c0_i32, %c0_i32_0 : i32, i32
  }
  func.func @transform_7(%arg0: i32) -> (i32, i32) {
    %c0_i32 = arith.constant 0 : i32
    %c0_i32_0 = arith.constant 0 : i32
    %c0_i32_1 = arith.constant 0 : i32
    return %c0_i32, %c0_i32_0 : i32, i32
  }
  func.func @transform_8(%arg0: i32) -> (i32, i32) {
    %c0_i32 = arith.constant 0 : i32
    %c0_i32_0 = arith.constant 0 : i32
    %c0_i32_1 = arith.constant 0 : i32
    return %c0_i32, %c0_i32_0 : i32, i32
  }
  func.func @transform_9(%arg0: i32) -> (i32, i32) {
    %c0_i32 = arith.constant 0 : i32
    %c0_i32_0 = arith.constant 0 : i32
    %c0_i32_1 = arith.constant 0 : i32
    return %c0_i32, %c0_i32_0 : i32, i32
  }
  func.func @transform_10(%arg0: i32) -> (i32, i32) {
    %c0_i32 = arith.constant 0 : i32
    %c0_i32_0 = arith.constant 0 : i32
    %c0_i32_1 = arith.constant 0 : i32
    return %c0_i32, %c0_i32_0 : i32, i32
  }
  func.func @transform_11(%arg0: i32) -> (i32, i32) {
    %c0_i32 = arith.constant 0 : i32
    %c0_i32_0 = arith.constant 0 : i32
    %c0_i32_1 = arith.constant 0 : i32
    return %c0_i32, %c0_i32_0 : i32, i32
  }
  func.func @transform_12(%arg0: i32) -> (i32, i32) {
    %c0_i32 = arith.constant 0 : i32
    %c0_i32_0 = arith.constant 0 : i32
    %c0_i32_1 = arith.constant 0 : i32
    return %c0_i32, %c0_i32_0 : i32, i32
  }
  func.func @transform_13(%arg0: i32) -> (i32, i32, i32) {
    %c0_i32 = arith.constant 0 : i32
    %c0_i32_0 = arith.constant 0 : i32
    %c0_i32_1 = arith.constant 0 : i32
    return %arg0, %c0_i32, %c0_i32_0 : i32, i32, i32
  }
}

</mosaic_0001>

<llo_original>
// kernel: tpu_custom_call.1
$region0: #{tpu_custom_call.1}
  #allocation0 [shape = 'u32[]', space=smem, size = 0x4, offset = 0x4, fixed_abs, tag = 'smem constant byte address 0x4 - core index']
  #allocation1 [shape = 'u32[72,128]{1,0:T(1,128)}', space=vmem, size = 0x9000, scoped, tag = 'internal scratch']
  #allocation2 [shape = 'f32[1,1]{1,0:T(1,128)S(6)}', space=smem, size = 0x200, scoped, tag = 'scoped memory for tpu_custom_call.1']
  %s0 = inlined_call_operand.hbm [shape: bf16[16,32], index: 0, kind: input, shape index: {}]
  %s1 = inlined_call_operand.vmem [shape: bf16[32,64], index: 1, kind: input, shape index: {}]
  %s2 = inlined_call_operand.vmem [shape: f32[1,64], index: 2, kind: input, shape index: {}]
  %s3 = inlined_call_operand.vmem [shape: bf16[64,64], index: 3, kind: input, shape index: {}]
  %s4 = inlined_call_operand.vmem [shape: f32[1,64], index: 4, kind: input, shape index: {}]
  %s5 = inlined_call_operand.vmem [shape: bf16[64,32], index: 5, kind: input, shape index: {}]
  %s6 = inlined_call_operand.hbm [shape: f32[32,32], index: 6, kind: input, shape index: {}]
  %s7 = inlined_call_operand.vmem [shape: f32[1,32], index: 7, kind: input, shape index: {}]
  %s8 = inlined_call_operand.vmem [shape: f32[1,32], index: 8, kind: input, shape index: {}]
  %s9 = inlined_call_operand.hbm [shape: bf16[32,32], index: 9, kind: input, shape index: {}]
  %s10 = inlined_call_operand.vmem [shape: f32[1,32], index: 10, kind: input, shape index: {}]
  %s11 = inlined_call_operand.vmem [shape: f32[1,32], index: 11, kind: input, shape index: {}]
  %s12 = inlined_call_operand.<no memory space> [shape: f32[1,1], index: 12, kind: input, shape index: {}]
  %s13 = inlined_call_operand.hbm [shape: f32[1,1,16], index: 13, kind: output, shape index: {}]
  %s14 = sld [smem:[#allocation0]]
  $region74: #{tpu_custom_call.1} parent=0
    _
  %s16 = ssub.s32 1, %s14
  %s17 = scalar_select 0, %s16, %s14
  %18 = sst [smem:[#allocation2]] %s12
  $region1: #{tpu_custom_call.1} parent=0
    #allocation3 [shape = 'u8[4096]{0}', space=vmem, size = 0x1000, scoped, tag = 'input window, operand 0, single buffered']
    #allocation4 [shape = 's32[1]{0}', space=sflag, size = 0x4, scoped, tag = 'scoped memory for tpu_custom_call.1']
    #allocation5 [shape = 's32[1]{0}', space=sflag, size = 0x4, scoped, tag = 'scoped memory for tpu_custom_call.1']
    #allocation6 [shape = 'u8[16384]{0}', space=vmem, size = 0x4000, scoped, tag = 'input window, operand 6, single buffered']
    #allocation7 [shape = 's32[1]{0}', space=sflag, size = 0x4, scoped, tag = 'scoped memory for tpu_custom_call.1']
    #allocation8 [shape = 'u8[8192]{0}', space=vmem, size = 0x2000, scoped, tag = 'input window, operand 9, single buffered']
    #allocation9 [shape = 'u8[512]{0}', space=vmem, size = 0x400, scoped, tag = 'output window, operand 0, single buffered']
    %19 = vsyncpa [#allocation4], 0
    %20 = vsyncpa [#allocation7], 0
    %21 = vsyncpa [#allocation5], 0
    // Predicated region
    $region2: #{tpu_custom_call.1} parent=1 // pred_check
      _
    $region3: #{tpu_custom_call.1} parent=1 // pred_check_branch
      %23 = sbr.rel (0) target = $region5
    $region4: #{tpu_custom_call.1} parent=1 // pred_region
      %25 = vsyncadd [#allocation4], 0
      %s26 = sshll.u32 %s0, 4
      %s27 = int_to_ptr.hbm [resolvable:$true] %s26
      %s28 = sshll.u32 [#allocation3], 4
      %s29 = int_to_ptr.vmem [resolvable:$true] %s28
      %34 = dma.hbm_to_vmem [thread:$0]  %s27, 128, %s29, [#allocation4], 64, 64, 4
    $region5: #{tpu_custom_call.1} parent=1 // pred_fallthru
      _
    // Predicated region
    $region6: #{tpu_custom_call.1} parent=1 // pred_check
      _
    $region7: #{tpu_custom_call.1} parent=1 // pred_check_branch
      %36 = sbr.rel (0) target = $region9
    $region8: #{tpu_custom_call.1} parent=1 // pred_region
      _
    $region9: #{tpu_custom_call.1} parent=1 // pred_fallthru
      _
    // Predicated region
    $region10: #{tpu_custom_call.1} parent=1 // pred_check
      _
    $region11: #{tpu_custom_call.1} parent=1 // pred_check_branch
      %38 = sbr.rel (0) target = $region13
    $region12: #{tpu_custom_call.1} parent=1 // pred_region
      _
    $region13: #{tpu_custom_call.1} parent=1 // pred_fallthru
      _
    // Predicated region
    $region14: #{tpu_custom_call.1} parent=1 // pred_check
      _
    $region15: #{tpu_custom_call.1} parent=1 // pred_check_branch
      %40 = sbr.rel (0) target = $region17
    $region16: #{tpu_custom_call.1} parent=1 // pred_region
      _
    $region17: #{tpu_custom_call.1} parent=1 // pred_fallthru
      _
    // Predicated region
    $region18: #{tpu_custom_call.1} parent=1 // pred_check
      _
    $region19: #{tpu_custom_call.1} parent=1 // pred_check_branch
      %42 = sbr.rel (0) target = $region21
    $region20: #{tpu_custom_call.1} parent=1 // pred_region
      _
    $region21: #{tpu_custom_call.1} parent=1 // pred_fallthru
      _
    // Predicated region
    $region22: #{tpu_custom_call.1} parent=1 // pred_check
      _
    $region23: #{tpu_custom_call.1} parent=1 // pred_check_branch
      %44 = sbr.rel (0) target = $region25
    $region24: #{tpu_custom_call.1} parent=1 // pred_region
      _
    $region25: #{tpu_custom_call.1} parent=1 // pred_fallthru
      _
    // Predicated region
    $region26: #{tpu_custom_call.1} parent=1 // pred_check
      _
    $region27: #{tpu_custom_call.1} parent=1 // pred_check_branch
      %46 = sbr.rel (0) target = $region29
    $region28: #{tpu_custom_call.1} parent=1 // pred_region
      %48 = vsyncadd [#allocation7], 0
      %s49 = sshll.u32 %s6, 4
      %s50 = int_to_ptr.hbm [resolvable:$true] %s49
      %s51 = sshll.u32 [#allocation6], 4
      %s52 = int_to_ptr.vmem [resolvable:$true] %s51
      %57 = dma.hbm_to_vmem [thread:$0]  %s50, 512, %s52, [#allocation7], 128, 128, 8
    $region29: #{tpu_custom_call.1} parent=1 // pred_fallthru
      _
    // Predicated region
    $region30: #{tpu_custom_call.1} parent=1 // pred_check
      _
    $region31: #{tpu_custom_call.1} parent=1 // pred_check_branch
      %59 = sbr.rel (0) target = $region33
    $region32: #{tpu_custom_call.1} parent=1 // pred_region
      _
    $region33: #{tpu_custom_call.1} parent=1 // pred_fallthru
      _
    // Predicated region
    $region34: #{tpu_custom_call.1} parent=1 // pred_check
      _
    $region35: #{tpu_custom_call.1} parent=1 // pred_check_branch
      %61 = sbr.rel (0) target = $region37
    $region36: #{tpu_custom_call.1} parent=1 // pred_region
      _
    $region37: #{tpu_custom_call.1} parent=1 // pred_fallthru
      _
    // Predicated region
    $region38: #{tpu_custom_call.1} parent=1 // pred_check
      _
    $region39: #{tpu_custom_call.1} parent=1 // pred_check_branch
      %63 = sbr.rel (0) target = $region41
    $region40: #{tpu_custom_call.1} parent=1 // pred_region
      %65 = vsyncadd [#allocation7], 0
      %s66 = sshll.u32 %s9, 4
      %s67 = int_to_ptr.hbm [resolvable:$true] %s66
      %s68 = sshll.u32 [#allocation8], 4
      %s69 = int_to_ptr.vmem [resolvable:$true] %s68
      %74 = dma.hbm_to_vmem [thread:$0]  %s67, 256, %s69, [#allocation7], 64, 64, 4
    $region41: #{tpu_custom_call.1} parent=1 // pred_fallthru
      _
    // Predicated region
    $region42: #{tpu_custom_call.1} parent=1 // pred_check
      _
    $region43: #{tpu_custom_call.1} parent=1 // pred_check_branch
      %76 = sbr.rel (0) target = $region45
    $region44: #{tpu_custom_call.1} parent=1 // pred_region
      _
    $region45: #{tpu_custom_call.1} parent=1 // pred_fallthru
      _
    // Predicated region
    $region46: #{tpu_custom_call.1} parent=1 // pred_check
      _
    $region47: #{tpu_custom_call.1} parent=1 // pred_check_branch
      %78 = sbr.rel (0) target = $region49
    $region48: #{tpu_custom_call.1} parent=1 // pred_region
      _
    $region49: #{tpu_custom_call.1} parent=1 // pred_fallthru
      _
    // Predicated region
    $region50: #{tpu_custom_call.1} parent=1 // pred_check
      _
    $region51: #{tpu_custom_call.1} parent=1 // pred_check_branch
      %80 = sbr.rel (0) target = $region53
    $region52: #{tpu_custom_call.1} parent=1 // pred_region
      _
    $region53: #{tpu_custom_call.1} parent=1 // pred_fallthru
      _
    // Predicated region
    $region54: #{tpu_custom_call.1} parent=1 // pred_check
      _
    $region55: #{tpu_custom_call.1} parent=1 // pred_check_branch
      %82 = sbr.rel (0) target = $region57
    $region56: #{tpu_custom_call.1} parent=1 // pred_region
      %84 = dma.done [#allocation4], 128
    $region57: #{tpu_custom_call.1} parent=1 // pred_fallthru
      _
    // Predicated region
    $region58: #{tpu_custom_call.1} parent=1 // pred_check
      _
    $region59: #{tpu_custom_call.1} parent=1 // pred_check_branch
      %86 = sbr.rel (0) target = $region61
    $region60: #{tpu_custom_call.1} parent=1 // pred_region
      %88 = dma.done [#allocation7], 512
    $region61: #{tpu_custom_call.1} parent=1 // pred_fallthru
      _
    // Predicated region
    $region62: #{tpu_custom_call.1} parent=1 // pred_check
      _
    $region63: #{tpu_custom_call.1} parent=1 // pred_check_branch
      %90 = sbr.rel (0) target = $region65
    $region64: #{tpu_custom_call.1} parent=1 // pred_region
      %92 = dma.done [#allocation7], 256
    $region65: #{tpu_custom_call.1} parent=1 // pred_fallthru
      _
    %v94 = vld [vmem:[#allocation3] sm:$0xf]
    %v95 = vld [vmem:[#allocation3 + $0x4] sm:$0xf]
    %v96 = vld [vmem:[%s1] sm:$0xf]
    %v97 = vld [vmem:[%s1 + $0x4] sm:$0xf]
    %v98 = vld [vmem:[%s1 + $0x8] sm:$0xf]
    %v99 = vld [vmem:[%s1 + $0xc] sm:$0xf]
    %v100 = vld [vmem:[%s2] sm:$0x1]
    %v102 = vperm.slane %v100, 0
    %v106 = vunpack.c.l.b16 %v94
    %v107 = vunpack.c.l.b16 %v95
    %v108 = vpack.c.b16 %v107, %v106
    %v113 = vunpack.c.l.b16 %v96
    %v114 = vunpack.c.l.b16 %v97
    %v115 = vunpack.c.l.b16 %v98
    %v116 = vunpack.c.l.b16 %v99
    %v117 = vpack.c.b16 %v114, %v113
    %v118 = vpack.c.b16 %v116, %v115
    %vm121 = vcmask 261120
    %v123 = vsel %vm121, %v108, 0
    %125 = vmatpush.bf16.msra.mxu0 0
    %126 = vmatpush.bf16.msra.mxu0 0
    %127 = vmatpush.bf16.msra.mxu0 0
    %128 = vmatpush.bf16.msra.mxu0 0
    %129 = vmatpush.bf16.msra.mxu0 0
    %130 = vmatpush.bf16.msra.mxu0 0
    %131 = vmatpush.bf16.msra.mxu0 %v118
    %132 = vmatpush.bf16.msra.mxu0 %v117
    %133 = vmatmul.bf16.gmra.mxu0 %v123
    %v134 = vpop.f32.mrf.mxu0
    %v135 = vadd.f32 %v102, %v134
    %v136 = vpop.f32.mrf.mxu0
    %v137 = vadd.f32 %v102, %v136
    %138 = vdwg.mxu0
    %v139 = vmax.f32 %v135, 0.0
    %v140 = vmax.f32 %v137, 0.0
    %v141 = vpack.c.bf16 %v140, %v139
    %v142 = vld [vmem:[%s3] sm:$0xf]
    %v143 = vld [vmem:[%s3 + $0x4] sm:$0xf]
    %v144 = vld [vmem:[%s3 + $0x8] sm:$0xf]
    %v145 = vld [vmem:[%s3 + $0xc] sm:$0xf]
    %v146 = vld [vmem:[%s3 + $0x10] sm:$0xf]
    %v147 = vld [vmem:[%s3 + $0x14] sm:$0xf]
    %v148 = vld [vmem:[%s3 + $0x18] sm:$0xf]
    %v149 = vld [vmem:[%s3 + $0x1c] sm:$0xf]
    %v150 = vld [vmem:[%s4] sm:$0x1]
    %v152 = vperm.slane %v150, 0
    %v162 = vunpack.c.l.b16 %v142
    %v163 = vunpack.c.l.b16 %v143
    %v164 = vunpack.c.l.b16 %v144
    %v165 = vunpack.c.l.b16 %v145
    %v166 = vunpack.c.l.b16 %v146
    %v167 = vunpack.c.l.b16 %v147
    %v168 = vunpack.c.l.b16 %v148
    %v169 = vunpack.c.l.b16 %v149
    %v170 = vpack.c.b16 %v163, %v162
    %v171 = vpack.c.b16 %v165, %v164
    %v172 = vpack.c.b16 %v167, %v166
    %v173 = vpack.c.b16 %v169, %v168
    %vm178 = vcmask 523264
    %v180 = vsel %vm178, %v141, 0
    %182 = vmatpush.bf16.msra.mxu0 0
    %183 = vmatpush.bf16.msra.mxu0 0
    %184 = vmatpush.bf16.msra.mxu0 0
    %185 = vmatpush.bf16.msra.mxu0 0
    %186 = vmatpush.bf16.msra.mxu0 %v173
    %187 = vmatpush.bf16.msra.mxu0 %v172
    %188 = vmatpush.bf16.msra.mxu0 %v171
    %189 = vmatpush.bf16.msra.mxu0 %v170
    %190 = vmatmul.bf16.gmra.mxu0 %v180
    %v191 = vpop.f32.mrf.mxu0
    %v192 = vadd.f32 %v152, %v191
    %v193 = vpop.f32.mrf.mxu0
    %v194 = vadd.f32 %v152, %v193
    %195 = vdwg.mxu0
    %v196 = vunpack.c.l.bf16 %v94
    %v197 = vunpack.c.l.bf16 %v95
    %200 = vrot.lane.b32.xlu0 %v196, 32
    %v201 = vpop.permute.xlu0 %200
    %202 = vrot.lane.b32.xlu0 %v197, 32
    %v203 = vpop.permute.xlu0 %202
    %v206 = vsel %vm121, %v196, %v201
    %v207 = vsel %vm121, %v197, %v203
    %v208 = vmul.f32 %v192, %v206
    %v209 = vmul.f32 %v194, %v207
    %v210 = vpack.c.bf16 %v209, %v208
    %v211 = vld [vmem:[%s5] sm:$0xf]
    %v212 = vld [vmem:[%s5 + $0x4] sm:$0xf]
    %v213 = vld [vmem:[%s5 + $0x8] sm:$0xf]
    %v214 = vld [vmem:[%s5 + $0xc] sm:$0xf]
    %v215 = vld [vmem:[%s5 + $0x10] sm:$0xf]
    %v216 = vld [vmem:[%s5 + $0x14] sm:$0xf]
    %v217 = vld [vmem:[%s5 + $0x18] sm:$0xf]
    %v218 = vld [vmem:[%s5 + $0x1c] sm:$0xf]
    %v227 = vunpack.c.l.b16 %v211
    %v228 = vunpack.c.l.b16 %v212
    %v229 = vunpack.c.l.b16 %v213
    %v230 = vunpack.c.l.b16 %v214
    %v231 = vunpack.c.l.b16 %v215
    %v232 = vunpack.c.l.b16 %v216
    %v233 = vunpack.c.l.b16 %v217
    %v234 = vunpack.c.l.b16 %v218
    %v235 = vpack.c.b16 %v228, %v227
    %v236 = vpack.c.b16 %v230, %v229
    %v237 = vpack.c.b16 %v232, %v231
    %v238 = vpack.c.b16 %v234, %v233
    %v244 = vsel %vm178, %v210, 0
    %246 = vmatpush.bf16.msra.mxu0 0
    %247 = vmatpush.bf16.msra.mxu0 0
    %248 = vmatpush.bf16.msra.mxu0 0
    %249 = vmatpush.bf16.msra.mxu0 0
    %250 = vmatpush.bf16.msra.mxu0 %v238
    %251 = vmatpush.bf16.msra.mxu0 %v237
    %252 = vmatpush.bf16.msra.mxu0 %v236
    %253 = vmatpush.bf16.msra.mxu0 %v235
    %254 = vmatmul.bf16.gmra.mxu0 %v244
    %v255 = vpop.f32.mrf.mxu0
    %v256 = vadd.f32 0.0, %v255
    %v257 = vpop.f32.mrf.mxu0
    %v258 = vadd.f32 0.0, %v257
    %259 = vdwg.mxu0
    %v260 = vld [vmem:[#allocation6] sm:$0xff]
    %v261 = vld [vmem:[#allocation6 + $0x8] sm:$0xff]
    %v262 = vld [vmem:[#allocation6 + $0x10] sm:$0xff]
    %v263 = vld [vmem:[#allocation6 + $0x18] sm:$0xff]
    %v265 = vsel %vm121, %v256, 0
    %v268 = vsel %vm121, %v258, 0
    %270 = vmatpush.msra.mxu0 0.0
    %271 = vmatpush.msra.mxu0 0.0
    %272 = vmatpush.msra.mxu0 0.0
    %273 = vmatpush.msra.mxu0 0.0
    %274 = vmatpush.msra.mxu0 0.0
    %275 = vmatpush.msra.mxu0 0.0
    %276 = vmatpush.msra.mxu0 0.0
    %277 = vmatpush.msra.mxu0 0.0
    %278 = vmatpush.msra.mxu0 0.0
    %279 = vmatpush.msra.mxu0 0.0
    %280 = vmatpush.msra.mxu0 0.0
    %281 = vmatpush.msra.mxu0 0.0
    %282 = vmatpush.msra.mxu0 %v263
    %283 = vmatpush.msra.mxu0 %v262
    %284 = vmatpush.msra.mxu0 %v261
    %285 = vmatpush.msra.mxu0 %v260
    %286 = vmatmul.f32.gmra.mxu0 %v265
    %v287 = vpop.f32.mrf.mxu0
    %v288 = vadd.f32 0.0, %v287
    %289 = vmatmul.f32.gmra.mxu0 %v268
    %v290 = vpop.f32.mrf.mxu0
    %v291 = vadd.f32 0.0, %v290
    %292 = vdwg.mxu0
    %v293 = vmul.f32 %v256, %v256
    %v294 = vmul.f32 %v258, %v258
    %v296 = vsel %vm121, %v293, 0
    %v299 = vsel %vm121, %v294, 0
    %301 = vmatpush.msra.mxu0 0.0
    %302 = vmatpush.msra.mxu0 0.0
    %303 = vmatpush.msra.mxu0 0.0
    %304 = vmatpush.msra.mxu0 0.0
    %305 = vmatpush.msra.mxu0 0.0
    %306 = vmatpush.msra.mxu0 0.0
    %307 = vmatpush.msra.mxu0 0.0
    %308 = vmatpush.msra.mxu0 0.0
    %309 = vmatpush.msra.mxu0 0.0
    %310 = vmatpush.msra.mxu0 0.0
    %311 = vmatpush.msra.mxu0 0.0
    %312 = vmatpush.msra.mxu0 0.0
    %313 = vmatpush.msra.mxu0 %v263
    %314 = vmatpush.msra.mxu0 %v262
    %315 = vmatpush.msra.mxu0 %v261
    %316 = vmatpush.msra.mxu0 %v260
    %317 = vmatmul.f32.gmra.mxu0 %v296
    %v318 = vpop.f32.mrf.mxu0
    %v319 = vadd.f32 0.0, %v318
    %320 = vmatmul.f32.gmra.mxu0 %v299
    %v321 = vpop.f32.mrf.mxu0
    %v322 = vadd.f32 0.0, %v321
    %323 = vdwg.mxu0
    %v324 = vmul.f32 %v288, %v288
    %v325 = vmul.f32 %v291, %v291
    %v326 = vsub.f32 %v319, %v324
    %v327 = vsub.f32 %v322, %v325
    %v328 = vmax.f32 %v326, 0.0
    %v329 = vmax.f32 %v327, 0.0
    %v330 = vsub.f32 %v256, %v288
    %v331 = vsub.f32 %v258, %v291
    %v332 = vadd.f32 %v328, 1e-05
    %v333 = vadd.f32 %v329, 1e-05
    %v334 = vrsqrt.pop %v332
    %v335 = vmul.f32 %v334, %v332
    %v336 = vmul.f32 %v335, %v334
    %v337 = vmul.f32 0.5, %v336
    %v338 = vsub.f32 1.5, %v337
    %v339 = vmul.f32 %v334, %v338
    %vm340 = vweird.f32 %v332
    %vm341 = vweird.f32 %v334
    %vm342 = vmor %vm340, %vm341
    %v343 = vsel %vm342, %v334, %v339
    %v344 = vrsqrt.pop %v333
    %v345 = vmul.f32 %v344, %v333
    %v346 = vmul.f32 %v345, %v344
    %v347 = vmul.f32 0.5, %v346
    %v348 = vsub.f32 1.5, %v347
    %v349 = vmul.f32 %v344, %v348
    %vm350 = vweird.f32 %v333
    %vm351 = vweird.f32 %v344
    %vm352 = vmor %vm350, %vm351
    %v353 = vsel %vm352, %v344, %v349
    %v354 = vmul.f32 %v330, %v343
    %v355 = vmul.f32 %v331, %v353
    %v356 = vld [vmem:[%s7] sm:$0x1]
    %v358 = vperm.slane %v356, 0
    %v360 = vmul.f32 %v354, %v358
    %v361 = vmul.f32 %v355, %v358
    %v362 = vld [vmem:[%s8] sm:$0x1]
    %v364 = vperm.slane %v362, 0
    %v366 = vadd.f32 %v360, %v364
    %v367 = vadd.f32 %v361, %v364
    %v368 = vmax.f32 %v366, 0.0
    %v369 = vmax.f32 %v367, 0.0
    %v370 = vpack.c.bf16 %v369, %v368
    %v371 = vld [vmem:[#allocation8] sm:$0xf]
    %v372 = vld [vmem:[#allocation8 + $0x4] sm:$0xf]
    %v373 = vld [vmem:[#allocation8 + $0x8] sm:$0xf]
    %v374 = vld [vmem:[#allocation8 + $0xc] sm:$0xf]
    %v375 = vld [vmem:[%s10] sm:$0x1]
    %v377 = vperm.slane %v375, 0
    %v383 = vunpack.c.l.b16 %v371
    %v384 = vunpack.c.l.b16 %v372
    %v385 = vunpack.c.l.b16 %v373
    %v386 = vunpack.c.l.b16 %v374
    %v387 = vpack.c.b16 %v384, %v383
    %v388 = vpack.c.b16 %v386, %v385
    %v392 = vsel %vm121, %v370, 0
    %394 = vmatpush.bf16.msra.mxu0 0
    %395 = vmatpush.bf16.msra.mxu0 0
    %396 = vmatpush.bf16.msra.mxu0 0
    %397 = vmatpush.bf16.msra.mxu0 0
    %398 = vmatpush.bf16.msra.mxu0 0
    %399 = vmatpush.bf16.msra.mxu0 0
    %400 = vmatpush.bf16.msra.mxu0 %v388
    %401 = vmatpush.bf16.msra.mxu0 %v387
    %402 = vmatmul.bf16.gmra.mxu0 %v392
    %v403 = vpop.f32.mrf.mxu0
    %v404 = vadd.f32 %v377, %v403
    %v405 = vpop.f32.mrf.mxu0
    %v406 = vadd.f32 %v377, %v405
    %407 = vdwg.mxu0
    %v408 = vmax.f32 %v404, 0.0
    %v409 = vmax.f32 %v406, 0.0
    %v410 = vld [vmem:[%s11] sm:$0x1]
    %v412 = vperm.slane %v410, 0
    %v414 = vmul.f32 %v408, %v412
    %v415 = vmul.f32 %v409, %v412
    %v416 = vsel %vm121, %v414, 0.0
    %417 = vadd.xlane.f32.xlu0 %v416
    %v418 = vpop.xlane.xlu0 %417
    %v419 = vsel %vm121, %v415, 0.0
    %420 = vadd.xlane.f32.xlu0 %v419
    %v421 = vpop.xlane.xlu0 %420
    %s422 = sld [smem:[#allocation2]]
    %v423 = vstv %s422
    %v424 = vadd.f32 %v418, %v423
    %v425 = vadd.f32 %v421, %v423
    %v428 = vlaneseq
    %v429 = vand.u32 %v428, 127
    %v430 = vperm.slane %v424, %v429
    %v431 = vadd.s32 %v429, 4294967288
    %v432 = vperm.slane %v425, %v431
    %vm433 = vcmask 130112
    %v434 = vsel %vm433, %v432, %v430
    %vm436 = vcmask 122880
    %437 = vst.msk [vmem:[#allocation9] sm:$0x1] %vm436, %v434
    // Predicated region
    $region66: #{tpu_custom_call.1} parent=1 // pred_check
      _
    $region67: #{tpu_custom_call.1} parent=1 // pred_check_branch
      %439 = sbr.rel (0) target = $region69
    $region68: #{tpu_custom_call.1} parent=1 // pred_region
      %441 = vsyncadd [#allocation5], 0
      %s443 = sshll.u32 [#allocation9], 4
      %s444 = int_to_ptr.vmem [resolvable:$true] %s443
      %s445 = sshll.u32 %s13, 4
      %s446 = int_to_ptr.hbm [resolvable:$true] %s445
      %448 = dma.vmem_to_hbm [thread:$0]  %s444, 16, %s446, [#allocation5]
    $region69: #{tpu_custom_call.1} parent=1 // pred_fallthru
      _
    // Predicated region
    $region70: #{tpu_custom_call.1} parent=1 // pred_check
      _
    $region71: #{tpu_custom_call.1} parent=1 // pred_check_branch
      %450 = sbr.rel (0) target = $region73
    $region72: #{tpu_custom_call.1} parent=1 // pred_region
      %452 = dma.done [#allocation5], 16
    $region73: #{tpu_custom_call.1} parent=1 // pred_fallthru
      _
    %453 = vsyncpa [#allocation4], 1
    %454 = vsyncpa [#allocation7], 1
    %455 = vsyncpa [#allocation5], 1

</llo_original>
